<compile_context>
chip_gen: v7x
topology: tpu7x:2x2x1
jax: 0.10.0
libtpu: 0.0.40
codegen_flags: <defaults>
</compile_context>

<pallas_src>
import functools

import jax
import jax.numpy as jnp
from jax.experimental import pallas as pl
from jax.experimental.pallas import tpu as pltpu


def _round_up(x, m):
    return (x + m - 1) // m * m


# ---------------------------------------------------------------------------
# Pallas kernel: fused conv (stride 1) + folded BN + ReLU for one batch tile
# ---------------------------------------------------------------------------
def _conv_bn_relu_kernel(x_ref, w_ref, shift_ref, o_ref, *, KH, KW, Wp, Lc, Bt):
    """
    x_ref:     (Bt, Cin, Lin)        zero-padded input, spatial flattened as h*Wp + w (bf16)
    w_ref:     (Cout, KH*KW*Cin)     BN-scale-folded conv weight, tap-major contraction (bf16)
    shift_ref: (Cout, 1)             folded BN shift (includes conv bias), f32
    o_ref:     (Bt, Cout, Lc)        output, lane dim = flattened (padded-width) spatial, f32
    """
    offsets = [ky * Wp + kx for ky in range(KH) for kx in range(KW)]
    w = w_ref[...]                              # (Cout, KH*KW*Cin) bf16, hoisted
    shift = shift_ref[...]                      # (Cout, 1) f32, hoisted

    for b in range(Bt):                         # static unroll over batch tile
        x = x_ref[b]                            # (Cin, Lin) bf16
        # In-kernel im2col: stack the KH*KW lane-shifted windows once (XLU
        # rotates, separate slot from MXU/VPU), then one K=KH*KW*Cin matmul.
        xs = jnp.concatenate([x[:, off:off + Lc] for off in offsets], axis=0)
        acc = jnp.dot(w, xs, preferred_element_type=jnp.float32)   # (Cout, Lc)
        o_ref[b] = jnp.maximum(acc + shift, 0.0).astype(o_ref.dtype)


# ---------------------------------------------------------------------------
# Wrapper: layout plumbing + pallas_call
# ---------------------------------------------------------------------------
def conv_block_forward(x_nchw, params, *, kernel_size=3, padding=1, eps=1e-5,
                       batch_tile=None):
    """ConvBlock.forward: Conv2d(k, stride=1, padding=p, bias=True) -> BatchNorm2d(eval) -> ReLU.

    x_nchw: (B, Cin, H, W) float32 (PyTorch NCHW). Returns (B, Cout, Ho, Wo) float32.
    """
    # TODO(synk): stride>1, dilation>1, groups>1, non-ReLU activations and
    # training-mode BatchNorm (batch statistics) are not implemented.
    # TODO(synk): for large spatial/channel shapes on v7x, add a second
    # "parallel" spatially-tiled grid axis (with (KH-1)*Wp+(KW-1) halo) and
    # re-derive the per-step VMEM budget for the 64 MiB VMEM.
    B, Cin, H, W = x_nchw.shape
    KH = KW = kernel_size
    p = padding
    Cout = params['w'].shape[0]
    Hp, Wp = H + 2 * p, W + 2 * p
    Ho, Wo = Hp - KH + 1, Wp - KW + 1

    # Lane-dense geometry: output computed over padded width (garbage columns
    # at w >= Wo are discarded), lane width rounded up to a multiple of 128.
    Lc = _round_up(Ho * Wp, 128)                               # output lane width
    Lin = _round_up((KH - 1) * Wp + (KW - 1) + Lc, 128)        # input slab lane width

    bt = B if batch_tile is None else batch_tile               # images per grid step
    assert B % bt == 0, "batch_tile must divide batch"

    # Pad + flatten + cast activations to bf16 in the wrapper (half DMA bytes).
    xp = jnp.pad(x_nchw, ((0, 0), (0, 0), (p, p), (p, p)))     # spatial zero pad
    xf = xp.reshape(B, Cin, Hp * Wp).astype(jnp.bfloat16)
    xf = jnp.pad(xf, ((0, 0), (0, 0), (0, Lin - Hp * Wp)))     # lane pad (zeros)

    # Fold BN scale into the conv weights (in f32, before the bf16 cast) and
    # reshape to tap-major contraction: col index = (ky*KW + kx)*Cin + cin.
    inv_std = params['gamma'] / jnp.sqrt(params['rvar'] + eps)
    w_scaled = params['w'] * inv_std.reshape(Cout, 1, 1, 1)            # (Cout,Cin,KH,KW) f32
    w2 = jnp.transpose(w_scaled, (0, 2, 3, 1)).reshape(Cout, KH * KW * Cin)
    w2 = w2.astype(jnp.bfloat16)

    # Remaining per-channel shift (conv bias + BN mean/beta).
    shift = (params['beta'] + (params['bias'] - params['rmean']) * inv_std)
    shift = shift.reshape(Cout, 1).astype(jnp.float32)

    # Explicit VMEM budget (double-buffered I/O + weights), clamped to safe range.
    step_bytes = 2 * (bt * Cin * Lin * 2 + bt * Cout * Lc * 4) \
        + Cout * KH * KW * Cin * 2 + Cout * 4
    vmem_limit = int(min(64 * 2**20, max(16 * 2**20, 4 * step_bytes)))

    kernel = functools.partial(_conv_bn_relu_kernel,
                               KH=KH, KW=KW, Wp=Wp, Lc=Lc, Bt=bt)
    out = pl.pallas_call(
        kernel,
        out_shape=jax.ShapeDtypeStruct((B, Cout, Lc), jnp.float32),
        grid=(B // bt,),
        in_specs=[
            pl.BlockSpec((bt, Cin, Lin), lambda b: (b, 0, 0)),
            pl.BlockSpec((Cout, KH * KW * Cin), lambda b: (0, 0)),
            pl.BlockSpec((Cout, 1), lambda b: (0, 0)),
        ],
        out_specs=pl.BlockSpec((bt, Cout, Lc), lambda b: (b, 0, 0)),
        compiler_params=pltpu.CompilerParams(
            dimension_semantics=("parallel",),
            vmem_limit_bytes=vmem_limit),
    )(xf, w2, shift)

    # Drop lane padding / garbage padded-width columns, back to NCHW.
    # TODO(synk): fuse this crop into the consumer (or masked in-kernel store)
    # to cut output HBM traffic on v5e.
    out = out[:, :, :Ho * Wp].reshape(B, Cout, Ho, Wp)[:, :, :, :Wo]
    return out


# ---------------------------------------------------------------------------
# Pure-XLA f32 reference (for correctness check)
# ---------------------------------------------------------------------------
def conv_block_reference(x, params, eps=1e-5):
    out = jax.lax.conv_general_dilated(
        x, params['w'], window_strides=(1, 1), padding=((1, 1), (1, 1)),
        dimension_numbers=('NCHW', 'OIHW', 'NCHW'))
    out = out + params['bias'].reshape(1, -1, 1, 1)
    inv_std = (params['gamma'] / jnp.sqrt(params['rvar'] + eps)).reshape(1, -1, 1, 1)
    out = (out - params['rmean'].reshape(1, -1, 1, 1)) * inv_std
    out = out + params['beta'].reshape(1, -1, 1, 1)
    return jnp.maximum(out, 0.0)


if __name__ == "__main__":
    key = jax.random.PRNGKey(0)
    kx, kw, kb, kg, kbt, km, kv = jax.random.split(key, 7)

    B, Cin, H, W = 2, 4, 16, 16
    Cout = 16

    x = jax.random.normal(kx, (B, Cin, H, W), jnp.float32)
    params = dict(
        w=jax.random.normal(kw, (Cout, Cin, 3, 3), jnp.float32) * 0.05,
        bias=jax.random.normal(kb, (Cout,), jnp.float32) * 0.05,
        gamma=1.0 + 0.1 * jax.random.normal(kg, (Cout,), jnp.float32),
        beta=0.1 * jax.random.normal(kbt, (Cout,), jnp.float32),
        rmean=0.1 * jax.random.normal(km, (Cout,), jnp.float32),
        rvar=jax.random.uniform(kv, (Cout,), jnp.float32, minval=0.5, maxval=1.5),
    )

    out = jax.jit(conv_block_forward)(x, params)
    out = jax.block_until_ready(out)
    assert out.shape == (B, Cout, H, W)
    assert bool(jnp.all(jnp.isfinite(out)))

    ref = conv_block_reference(x, params)
    max_err = float(jnp.max(jnp.abs(out - ref)))
    assert max_err < 5e-2, f"max abs err vs f32 reference: {max_err}"

    print("KERNEL_OK")
</pallas_src>

<mosaic_0001>
module attributes {stable_mosaic.version = 11 : i64} {
  func.func @_conv_bn_relu_kernel(%arg0: i32, %arg1: memref<2x4x512xbf16, #tpu.memory_space<vmem>>, %arg2: memref<16x36xbf16, #tpu.memory_space<vmem>>, %arg3: memref<16x1xf32, #tpu.memory_space<vmem>>, %arg4: memref<2x16x384xf32, #tpu.memory_space<vmem>>) attributes {dimension_semantics = [#tpu.dimension_semantics<parallel>], iteration_bounds = array<i64: 1>, scalar_prefetch = 0 : i64, scratch_operands = 0 : i64, tpu.core_type = #tpu.core_type<tc>, window_params = [{transform_indices = @transform_0, window_bounds = array<i64: 2, 4, 512>}, {pipeline_mode = #tpu.pipeline_mode<synchronous>, transform_indices = @transform_1, window_bounds = array<i64: 16, 36>}, {pipeline_mode = #tpu.pipeline_mode<synchronous>, transform_indices = @transform_2, window_bounds = array<i64: 16, 1>}, {transform_indices = @transform_3, window_bounds = array<i64: 2, 16, 384>}]} {
    %c0 = arith.constant 0 : index
    %c0_0 = arith.constant 0 : index
    %0 = vector.load %arg2[%c0, %c0_0] : memref<16x36xbf16, #tpu.memory_space<vmem>>, vector<16x36xbf16>
    %c0_1 = arith.constant 0 : index
    %c0_2 = arith.constant 0 : index
    %1 = vector.load %arg3[%c0_1, %c0_2] : memref<16x1xf32, #tpu.memory_space<vmem>>, vector<16x1xf32>
    %c0_3 = arith.constant 0 : index
    %c0_4 = arith.constant 0 : index
    %c0_5 = arith.constant 0 : index
    %2 = vector.load %arg1[%c0_3, %c0_4, %c0_5] : memref<2x4x512xbf16, #tpu.memory_space<vmem>>, vector<1x4x512xbf16>
    %3 = vector.shape_cast %2 : vector<1x4x512xbf16> to vector<4x512xbf16>
    %4 = vector.extract_strided_slice %3 {offsets = [0, 0], sizes = [4, 384], strides = [1, 1]} : vector<4x512xbf16> to vector<4x384xbf16>
    %5 = vector.extract_strided_slice %3 {offsets = [0, 1], sizes = [4, 384], strides = [1, 1]} : vector<4x512xbf16> to vector<4x384xbf16>
    %6 = vector.extract_strided_slice %3 {offsets = [0, 2], sizes = [4, 384], strides = [1, 1]} : vector<4x512xbf16> to vector<4x384xbf16>
    %7 = vector.extract_strided_slice %3 {offsets = [0, 18], sizes = [4, 384], strides = [1, 1]} : vector<4x512xbf16> to vector<4x384xbf16>
    %8 = vector.extract_strided_slice %3 {offsets = [0, 19], sizes = [4, 384], strides = [1, 1]} : vector<4x512xbf16> to vector<4x384xbf16>
    %9 = vector.extract_strided_slice %3 {offsets = [0, 20], sizes = [4, 384], strides = [1, 1]} : vector<4x512xbf16> to vector<4x384xbf16>
    %10 = vector.extract_strided_slice %3 {offsets = [0, 36], sizes = [4, 384], strides = [1, 1]} : vector<4x512xbf16> to vector<4x384xbf16>
    %11 = vector.extract_strided_slice %3 {offsets = [0, 37], sizes = [4, 384], strides = [1, 1]} : vector<4x512xbf16> to vector<4x384xbf16>
    %12 = vector.extract_strided_slice %3 {offsets = [0, 38], sizes = [4, 384], strides = [1, 1]} : vector<4x512xbf16> to vector<4x384xbf16>
    %13 = tpu.concatenate %4, %5, %6, %7, %8, %9, %10, %11, %12 in 0 : vector<4x384xbf16>, vector<4x384xbf16>, vector<4x384xbf16>, vector<4x384xbf16>, vector<4x384xbf16>, vector<4x384xbf16>, vector<4x384xbf16>, vector<4x384xbf16>, vector<4x384xbf16> -> vector<36x384xbf16>
    %cst = arith.constant dense<0.000000e+00> : vector<16x384xf32>
    %14 = tpu.matmul %0, %13, %cst {dimension_numbers = #tpu.dot_dimension_numbers<[1], [0], [0], [1], [0, 0, 1, 1], [], []>} : vector<16x36xbf16>, vector<36x384xbf16>, vector<16x384xf32> -> vector<16x384xf32>
    %15 = vector.broadcast %1 : vector<16x1xf32> to vector<16x384xf32>
    %16 = arith.addf %14, %15 : vector<16x384xf32>
    %cst_6 = arith.constant 0.000000e+00 : f32
    %17 = vector.broadcast %cst_6 : f32 to vector<16x384xf32>
    %18 = arith.maximumf %16, %17 : vector<16x384xf32>
    %c0_7 = arith.constant 0 : index
    %c0_8 = arith.constant 0 : index
    %c0_9 = arith.constant 0 : index
    %19 = vector.load %arg4[%c0_7, %c0_8, %c0_9] : memref<2x16x384xf32, #tpu.memory_space<vmem>>, vector<1x16x384xf32>
    %20 = vector.shape_cast %19 : vector<1x16x384xf32> to vector<16x384xf32>
    %21 = vector.shape_cast %18 : vector<16x384xf32> to vector<1x16x384xf32>
    tpu.vector_store %arg4[%c0_7, %c0_8, %c0_9], %21 {strides = array<i32>} : memref<2x16x384xf32, #tpu.memory_space<vmem>>, vector<1x16x384xf32>,
    %c1 = arith.constant 1 : index
    %c0_10 = arith.constant 0 : index
    %c0_11 = arith.constant 0 : index
    %22 = vector.load %arg1[%c1, %c0_10, %c0_11] : memref<2x4x512xbf16, #tpu.memory_space<vmem>>, vector<1x4x512xbf16>
    %23 = vector.shape_cast %22 : vector<1x4x512xbf16> to vector<4x512xbf16>
    %24 = vector.extract_strided_slice %23 {offsets = [0, 0], sizes = [4, 384], strides = [1, 1]} : vector<4x512xbf16> to vector<4x384xbf16>
    %25 = vector.extract_strided_slice %23 {offsets = [0, 1], sizes = [4, 384], strides = [1, 1]} : vector<4x512xbf16> to vector<4x384xbf16>
    %26 = vector.extract_strided_slice %23 {offsets = [0, 2], sizes = [4, 384], strides = [1, 1]} : vector<4x512xbf16> to vector<4x384xbf16>
    %27 = vector.extract_strided_slice %23 {offsets = [0, 18], sizes = [4, 384], strides = [1, 1]} : vector<4x512xbf16> to vector<4x384xbf16>
    %28 = vector.extract_strided_slice %23 {offsets = [0, 19], sizes = [4, 384], strides = [1, 1]} : vector<4x512xbf16> to vector<4x384xbf16>
    %29 = vector.extract_strided_slice %23 {offsets = [0, 20], sizes = [4, 384], strides = [1, 1]} : vector<4x512xbf16> to vector<4x384xbf16>
    %30 = vector.extract_strided_slice %23 {offsets = [0, 36], sizes = [4, 384], strides = [1, 1]} : vector<4x512xbf16> to vector<4x384xbf16>
    %31 = vector.extract_strided_slice %23 {offsets = [0, 37], sizes = [4, 384], strides = [1, 1]} : vector<4x512xbf16> to vector<4x384xbf16>
    %32 = vector.extract_strided_slice %23 {offsets = [0, 38], sizes = [4, 384], strides = [1, 1]} : vector<4x512xbf16> to vector<4x384xbf16>
    %33 = tpu.concatenate %24, %25, %26, %27, %28, %29, %30, %31, %32 in 0 : vector<4x384xbf16>, vector<4x384xbf16>, vector<4x384xbf16>, vector<4x384xbf16>, vector<4x384xbf16>, vector<4x384xbf16>, vector<4x384xbf16>, vector<4x384xbf16>, vector<4x384xbf16> -> vector<36x384xbf16>
    %cst_12 = arith.constant dense<0.000000e+00> : vector<16x384xf32>
    %34 = tpu.matmul %0, %33, %cst_12 {dimension_numbers = #tpu.dot_dimension_numbers<[1], [0], [0], [1], [0, 0, 1, 1], [], []>} : vector<16x36xbf16>, vector<36x384xbf16>, vector<16x384xf32> -> vector<16x384xf32>
    %35 = vector.broadcast %1 : vector<16x1xf32> to vector<16x384xf32>
    %36 = arith.addf %34, %35 : vector<16x384xf32>
    %cst_13 = arith.constant 0.000000e+00 : f32
    %37 = vector.broadcast %cst_13 : f32 to vector<16x384xf32>
    %38 = arith.maximumf %36, %37 : vector<16x384xf32>
    %c1_14 = arith.constant 1 : index
    %c0_15 = arith.constant 0 : index
    %c0_16 = arith.constant 0 : index
    %39 = vector.load %arg4[%c1_14, %c0_15, %c0_16] : memref<2x16x384xf32, #tpu.memory_space<vmem>>, vector<1x16x384xf32>
    %40 = vector.shape_cast %39 : vector<1x16x384xf32> to vector<16x384xf32>
    %41 = vector.shape_cast %38 : vector<16x384xf32> to vector<1x16x384xf32>
    tpu.vector_store %arg4[%c1_14, %c0_15, %c0_16], %41 {strides = array<i32>} : memref<2x16x384xf32, #tpu.memory_space<vmem>>, vector<1x16x384xf32>,
    return
  }
  func.func @transform_0(%arg0: i32) -> (i32, i32, i32) {
    %c0_i32 = arith.constant 0 : i32
    %c0_i32_0 = arith.constant 0 : i32
    %c0_i32_1 = arith.constant 0 : i32
    return %arg0, %c0_i32, %c0_i32_0 : i32, i32, i32
  }
  func.func @transform_1(%arg0: i32) -> (i32, i32) {
    %c0_i32 = arith.constant 0 : i32
    %c0_i32_0 = arith.constant 0 : i32
    %c0_i32_1 = arith.constant 0 : i32
    return %c0_i32, %c0_i32_0 : i32, i32
  }
  func.func @transform_2(%arg0: i32) -> (i32, i32) {
    %c0_i32 = arith.constant 0 : i32
    %c0_i32_0 = arith.constant 0 : i32
    %c0_i32_1 = arith.constant 0 : i32
    return %c0_i32, %c0_i32_0 : i32, i32
  }
  func.func @transform_3(%arg0: i32) -> (i32, i32, i32) {
    %c0_i32 = arith.constant 0 : i32
    %c0_i32_0 = arith.constant 0 : i32
    %c0_i32_1 = arith.constant 0 : i32
    return %arg0, %c0_i32, %c0_i32_0 : i32, i32, i32
  }
}

</mosaic_0001>

<llo_original>
// kernel: conv_block_forward.1
$region0: #{conv_block_forward.1}
  #allocation0 [shape = 'u32[]', space=smem, size = 0x4, offset = 0x4, fixed_abs, tag = 'smem constant byte address 0x4 - core index']
  #allocation1 [shape = 'u32[144,128]{1,0:T(1,128)}', space=vmem, size = 0x12000, scoped, tag = 'internal scratch']
  %s0 = inlined_call_operand.vmem [shape: bf16[2,4,512], index: 0, kind: input, shape index: {}]
  %s1 = inlined_call_operand.vmem [shape: bf16[16,36], index: 1, kind: input, shape index: {}]
  %s2 = inlined_call_operand.vmem [shape: f32[16,1], index: 2, kind: input, shape index: {}]
  %s3 = inlined_call_operand.vmem [shape: f32[2,16,384], index: 3, kind: output, shape index: {}]
  %s4 = sld [smem:[#allocation0]]
  $region22: #{conv_block_forward.1} parent=0
    _
  %s6 = ssub.s32 1, %s4
  %s7 = scalar_select 0, %s6, %s4
  // Predicated region
  $region2: #{conv_block_forward.1} parent=0 // pred_check
    _
  $region3: #{conv_block_forward.1} parent=0 // pred_check_branch
    %9 = sbr.rel (0) target = $region5
  $region4: #{conv_block_forward.1} parent=0 // pred_region
    _
  $region5: #{conv_block_forward.1} parent=0 // pred_fallthru
    _
  // Predicated region
  $region6: #{conv_block_forward.1} parent=0 // pred_check
    _
  $region7: #{conv_block_forward.1} parent=0 // pred_check_branch
    %11 = sbr.rel (0) target = $region9
  $region8: #{conv_block_forward.1} parent=0 // pred_region
    _
  $region9: #{conv_block_forward.1} parent=0 // pred_fallthru
    _
  // Predicated region
  $region10: #{conv_block_forward.1} parent=0 // pred_check
    _
  $region11: #{conv_block_forward.1} parent=0 // pred_check_branch
    %13 = sbr.rel (0) target = $region13
  $region12: #{conv_block_forward.1} parent=0 // pred_region
    _
  $region13: #{conv_block_forward.1} parent=0 // pred_fallthru
    _
  %v15 = vld [vmem:[%s1] sm:$0xf]
  %v16 = vld [vmem:[%s1 + $0x4] sm:$0xf]
  %v17 = vld [vmem:[%s2] sm:$0xff]
  %v18 = vld [vmem:[%s2 + $0x8] sm:$0xff]
  %v19 = vld [vmem:[%s0] sm:$0xff]
  %v21 = vcombine.high %v19, %v19
  %v23 = vunpack.c.l.s4 1983009808
  %v24 = vunpack.c.0.s8 %v23
  %v25 = vlaneseq
  %v26 = vshrl.u32 %v25, 7
  %v27 = vsub.s32 %v24, %v26
  %v28 = vrot.slane %v19, %v27
  %v30 = vunpack.c.l.s4 1983009808
  %v31 = vunpack.c.0.s8 %v30
  %v32 = vlaneseq
  %v33 = vshrl.u32 %v32, 7
  %v34 = vsub.s32 %v31, %v33
  %v35 = vrot.slane %v21, %v34
  %v36 = vcombine.high %v28, %v28
  %v37 = vcombine.low %v19, %v19
  %v39 = vunpack.c.l.s4 1983009808
  %v40 = vunpack.c.0.s8 %v39
  %v41 = vlaneseq
  %v42 = vshrl.u32 %v41, 7
  %v43 = vsub.s32 %v40, %v42
  %v44 = vrot.slane %v37, %v43
  %v45 = vcombine.high %v44, %v44
  %46 = vrot.lane.b32.xlu0 %v44, 127
  %v47 = vpop.permute.xlu0 %46
  %48 = vrot.lane.b32.xlu0 %v45, 127
  %v49 = vpop.permute.xlu0 %48
  %50 = vrot.lane.b32.xlu0 %v28, 127
  %v51 = vpop.permute.xlu0 %50
  %52 = vrot.lane.b32.xlu0 %v36, 127
  %v53 = vpop.permute.xlu0 %52
  %vm54 = vcmask 1039360
  %v55 = vsel %vm54, %v47, %v49
  %v56 = vsel %vm54, %v49, %v51
  %v57 = vsel %vm54, %v51, %v53
  %v58 = vcombine.low %v28, %v28
  %v59 = vcombine.low %v35, %v35
  %60 = vrot.lane.b32.xlu0 %v58, 126
  %v61 = vpop.permute.xlu0 %60
  %62 = vrot.lane.b32.xlu0 %v28, 126
  %v63 = vpop.permute.xlu0 %62
  %64 = vrot.lane.b32.xlu0 %v59, 126
  %v65 = vpop.permute.xlu0 %64
  %66 = vrot.lane.b32.xlu0 %v35, 126
  %v67 = vpop.permute.xlu0 %66
  %vm68 = vcmask 1031168
  %v69 = vsel %vm68, %v61, %v63
  %v70 = vsel %vm68, %v63, %v65
  %v71 = vsel %vm68, %v65, %v67
  %v72 = vcombine.low %v44, %v44
  %73 = vrot.lane.b32.xlu0 %v72, 110
  %v74 = vpop.permute.xlu0 %73
  %75 = vrot.lane.b32.xlu0 %v44, 110
  %v76 = vpop.permute.xlu0 %75
  %77 = vrot.lane.b32.xlu0 %v58, 110
  %v78 = vpop.permute.xlu0 %77
  %79 = vrot.lane.b32.xlu0 %v28, 110
  %v80 = vpop.permute.xlu0 %79
  %vm81 = vcmask 900096
  %v82 = vsel %vm81, %v74, %v76
  %v83 = vsel %vm81, %v76, %v78
  %v84 = vsel %vm81, %v78, %v80
  %v85 = vcombine.high %v35, %v35
  %86 = vrot.lane.b32.xlu0 %v28, 109
  %v87 = vpop.permute.xlu0 %86
  %88 = vrot.lane.b32.xlu0 %v36, 109
  %v89 = vpop.permute.xlu0 %88
  %90 = vrot.lane.b32.xlu0 %v35, 109
  %v91 = vpop.permute.xlu0 %90
  %92 = vrot.lane.b32.xlu0 %v85, 109
  %v93 = vpop.permute.xlu0 %92
  %vm94 = vcmask 891904
  %v95 = vsel %vm94, %v87, %v89
  %v96 = vsel %vm94, %v89, %v91
  %v97 = vsel %vm94, %v91, %v93
  %98 = vrot.lane.b32.xlu0 %v44, 108
  %v99 = vpop.permute.xlu0 %98
  %100 = vrot.lane.b32.xlu0 %v45, 108
  %v101 = vpop.permute.xlu0 %100
  %102 = vrot.lane.b32.xlu0 %v28, 108
  %v103 = vpop.permute.xlu0 %102
  %104 = vrot.lane.b32.xlu0 %v36, 108
  %v105 = vpop.permute.xlu0 %104
  %vm106 = vcmask 883712
  %v107 = vsel %vm106, %v99, %v101
  %v108 = vsel %vm106, %v101, %v103
  %v109 = vsel %vm106, %v103, %v105
  %110 = vrot.lane.b32.xlu0 %v58, 92
  %v111 = vpop.permute.xlu0 %110
  %112 = vrot.lane.b32.xlu0 %v28, 92
  %v113 = vpop.permute.xlu0 %112
  %114 = vrot.lane.b32.xlu0 %v59, 92
  %v115 = vpop.permute.xlu0 %114
  %116 = vrot.lane.b32.xlu0 %v35, 92
  %v117 = vpop.permute.xlu0 %116
  %vm118 = vcmask 752640
  %v119 = vsel %vm118, %v111, %v113
  %v120 = vsel %vm118, %v113, %v115
  %v121 = vsel %vm118, %v115, %v117
  %122 = vrot.lane.b32.xlu0 %v72, 91
  %v123 = vpop.permute.xlu0 %122
  %124 = vrot.lane.b32.xlu0 %v44, 91
  %v125 = vpop.permute.xlu0 %124
  %126 = vrot.lane.b32.xlu0 %v58, 91
  %v127 = vpop.permute.xlu0 %126
  %128 = vrot.lane.b32.xlu0 %v28, 91
  %v129 = vpop.permute.xlu0 %128
  %vm130 = vcmask 744448
  %v131 = vsel %vm130, %v123, %v125
  %v132 = vsel %vm130, %v125, %v127
  %v133 = vsel %vm130, %v127, %v129
  %134 = vrot.lane.b32.xlu0 %v28, 90
  %v135 = vpop.permute.xlu0 %134
  %136 = vrot.lane.b32.xlu0 %v36, 90
  %v137 = vpop.permute.xlu0 %136
  %138 = vrot.lane.b32.xlu0 %v35, 90
  %v139 = vpop.permute.xlu0 %138
  %140 = vrot.lane.b32.xlu0 %v85, 90
  %v141 = vpop.permute.xlu0 %140
  %vm142 = vcmask 736256
  %v143 = vsel %vm142, %v135, %v137
  %v144 = vsel %vm142, %v137, %v139
  %v145 = vsel %vm142, %v139, %v141
  %vm146 = vcmask 1041408
  %v149 = vsel %vm146, %v28, %v55
  %v152 = vsel %vm146, %v36, %v56
  %v155 = vsel %vm146, %v35, %v57
  %vm156 = vcmask 1043456
  %v158 = vsel %vm156, %v149, %v69
  %v160 = vsel %vm156, %v152, %v70
  %v162 = vsel %vm156, %v155, %v71
  %vm163 = vcmask 1045504
  %v165 = vsel %vm163, %v158, %v82
  %v168 = vsel %vm163, %v160, %v83
  %v171 = vsel %vm163, %v162, %v84
  %v175 = vsel %vm146, %v95, %v107
  %v178 = vsel %vm146, %v96, %v108
  %v181 = vsel %vm146, %v97, %v109
  %v183 = vsel %vm156, %v175, %v119
  %v185 = vsel %vm156, %v178, %v120
  %v187 = vsel %vm156, %v181, %v121
  %v189 = vsel %vm163, %v183, %v131
  %v192 = vsel %vm163, %v185, %v132
  %v195 = vsel %vm163, %v187, %v133
  %198 = vset.pattern.permute.xlu0 0
  %199 = vperm.xlu0 %198, %v17
  %v200 = vpop.permute.xlu0 %199
  %203 = vset.pattern.permute.xlu0 0
  %204 = vperm.xlu0 %203, %v18
  %v205 = vpop.permute.xlu0 %204
  %v209 = vunpack.c.l.b16 %v15
  %v210 = vunpack.c.l.b16 %v16
  %v211 = vpack.c.b16 %v210, %v209
  %vm212 = vcmask 293888
  %v214 = vsel %vm212, %v211, 0
  %v217 = vsel %vm146, %v143, 0
  %v220 = vsel %vm146, %v144, 0
  %v223 = vsel %vm146, %v145, 0
  %225 = vmatprep.subr.bf16.mxu0 %v168
  %226 = vmatpush1.bf16.msra.mxu0 %v165
  %227 = vmatprep.subr.bf16.mxu0 %v192
  %228 = vmatpush1.bf16.msra.mxu0 %v189
  %229 = vmatprep.subr.bf16.mxu0 %v220
  %230 = vmatpush1.bf16.msra.mxu0 %v217
  %231 = vmatprep.subr.bf16.mxu0 0
  %232 = vmatpush1.bf16.msra.mxu0 0
  %233 = vmatprep.subr.bf16.mxu0 0
  %234 = vmatpush1.bf16.msra.mxu0 0
  %235 = vmatprep.subr.bf16.mxu0 0
  %236 = vmatpush1.bf16.msra.mxu0 0
  %237 = vmatprep.subr.bf16.mxu0 0
  %238 = vmatpush1.bf16.msra.mxu0 0
  %239 = vmatprep.subr.bf16.mxu0 0
  %240 = vmatpush1.bf16.msra.mxu0 0
  %241 = vmatprep.subr.bf16.mxu0 0
  %242 = vmatpush1.bf16.msra.mxu0 0
  %243 = vmatprep.subr.bf16.mxu0 0
  %244 = vmatpush1.bf16.msra.mxu0 0
  %245 = vmatprep.subr.bf16.mxu0 0
  %246 = vmatpush1.bf16.msra.mxu0 0
  %247 = vmatprep.subr.bf16.mxu0 0
  %248 = vmatpush1.bf16.msra.mxu0 0
  %249 = vmatprep.subr.bf16.mxu0 0
  %250 = vmatpush1.bf16.msra.mxu0 0
  %251 = vmatprep.subr.bf16.mxu0 0
  %252 = vmatpush1.bf16.msra.mxu0 0
  %253 = vmatprep.subr.bf16.mxu0 0
  %254 = vmatpush1.bf16.msra.mxu0 0
  %255 = vmatprep.subr.bf16.mxu0 0
  %256 = vmatpush1.bf16.msra.mxu0 0
  %257 = vmatprep.mubr.bf16.mxu0 0
  %258 = vmatmul.mubr.bf16.gmra.mrb[0].mxu0 %v214
  %v259 = vpop.f32.mrb[0].mxu0
  %v260 = vadd.f32 %v200, %v259
  %v261 = vpop.f32.mrb[0].mxu0
  %v262 = vadd.f32 %v200, %v261
  %v263 = vpop.f32.mrb[0].mxu0
  %v264 = vadd.f32 %v205, %v263
  %v265 = vpop.f32.mrb[0].mxu0
  %v266 = vadd.f32 %v205, %v265
  %267 = vdwg.mxu0
  %268 = vmatprep.subr.bf16.mxu0 0
  %269 = vmatpush1.bf16.msra.mxu0 %v171
  %270 = vmatprep.subr.bf16.mxu0 0
  %271 = vmatpush1.bf16.msra.mxu0 %v195
  %272 = vmatprep.subr.bf16.mxu0 0
  %273 = vmatpush1.bf16.msra.mxu0 %v223
  %274 = vmatprep.subr.bf16.mxu0 0
  %275 = vmatpush1.bf16.msra.mxu0 0
  %276 = vmatprep.subr.bf16.mxu0 0
  %277 = vmatpush1.bf16.msra.mxu0 0
  %278 = vmatprep.subr.bf16.mxu0 0
  %279 = vmatpush1.bf16.msra.mxu0 0
  %280 = vmatprep.subr.bf16.mxu0 0
  %281 = vmatpush1.bf16.msra.mxu0 0
  %282 = vmatprep.subr.bf16.mxu0 0
  %283 = vmatpush1.bf16.msra.mxu0 0
  %284 = vmatprep.subr.bf16.mxu0 0
  %285 = vmatpush1.bf16.msra.mxu0 0
  %286 = vmatprep.subr.bf16.mxu0 0
  %287 = vmatpush1.bf16.msra.mxu0 0
  %288 = vmatprep.subr.bf16.mxu0 0
  %289 = vmatpush1.bf16.msra.mxu0 0
  %290 = vmatprep.subr.bf16.mxu0 0
  %291 = vmatpush1.bf16.msra.mxu0 0
  %292 = vmatprep.subr.bf16.mxu0 0
  %293 = vmatpush1.bf16.msra.mxu0 0
  %294 = vmatprep.subr.bf16.mxu0 0
  %295 = vmatpush1.bf16.msra.mxu0 0
  %296 = vmatprep.subr.bf16.mxu0 0
  %297 = vmatpush1.bf16.msra.mxu0 0
  %298 = vmatprep.subr.bf16.mxu0 0
  %299 = vmatpush1.bf16.msra.mxu0 0
  %300 = vmatprep.mubr.bf16.mxu0 0
  %301 = vmatmul.mubr.bf16.gmra.mrb[0].mxu0 %v214
  %v302 = vpop.f32.mrb[0].mxu0
  %v303 = vadd.f32 %v200, %v302
  %v304 = vpop.f32.mrb[0].mxu0
  %v305 = vpop.f32.mrb[0].mxu0
  %v306 = vadd.f32 %v205, %v305
  %v307 = vpop.f32.mrb[0].mxu0
  %308 = vdwg.mxu0
  %v309 = vmax.f32 %v260, 0.0
  %v310 = vmax.f32 %v262, 0.0
  %v311 = vmax.f32 %v303, 0.0
  %v312 = vmax.f32 %v264, 0.0
  %v313 = vmax.f32 %v266, 0.0
  %v314 = vmax.f32 %v306, 0.0
  %315 = vst [vmem:[%s3] sm:$0xff] %v309
  %316 = vst [vmem:[%s3 + $0x8] sm:$0xff] %v310
  %317 = vst [vmem:[%s3 + $0x10] sm:$0xff] %v311
  %318 = vst [vmem:[%s3 + $0x18] sm:$0xff] %v312
  %319 = vst [vmem:[%s3 + $0x20] sm:$0xff] %v313
  %320 = vst [vmem:[%s3 + $0x28] sm:$0xff] %v314
  %s321 = scalar_lea.vmem %s0, 8
  %v322 = vld [vmem:[%s321] sm:$0xff]
  %v324 = vcombine.high %v322, %v322
  %v326 = vunpack.c.l.s4 1983009808
  %v327 = vunpack.c.0.s8 %v326
  %v328 = vlaneseq
  %v329 = vshrl.u32 %v328, 7
  %v330 = vsub.s32 %v327, %v329
  %v331 = vrot.slane %v322, %v330
  %v333 = vunpack.c.l.s4 1983009808
  %v334 = vunpack.c.0.s8 %v333
  %v335 = vlaneseq
  %v336 = vshrl.u32 %v335, 7
  %v337 = vsub.s32 %v334, %v336
  %v338 = vrot.slane %v324, %v337
  %v339 = vcombine.high %v331, %v331
  %v340 = vcombine.low %v322, %v322
  %v342 = vunpack.c.l.s4 1983009808
  %v343 = vunpack.c.0.s8 %v342
  %v344 = vlaneseq
  %v345 = vshrl.u32 %v344, 7
  %v346 = vsub.s32 %v343, %v345
  %v347 = vrot.slane %v340, %v346
  %v348 = vcombine.high %v347, %v347
  %349 = vrot.lane.b32.xlu0 %v347, 127
  %v350 = vpop.permute.xlu0 %349
  %351 = vrot.lane.b32.xlu0 %v348, 127
  %v352 = vpop.permute.xlu0 %351
  %353 = vrot.lane.b32.xlu0 %v331, 127
  %v354 = vpop.permute.xlu0 %353
  %355 = vrot.lane.b32.xlu0 %v339, 127
  %v356 = vpop.permute.xlu0 %355
  %v357 = vsel %vm54, %v350, %v352
  %v358 = vsel %vm54, %v352, %v354
  %v359 = vsel %vm54, %v354, %v356
  %v360 = vcombine.low %v331, %v331
  %v361 = vcombine.low %v338, %v338
  %362 = vrot.lane.b32.xlu0 %v360, 126
  %v363 = vpop.permute.xlu0 %362
  %364 = vrot.lane.b32.xlu0 %v331, 126
  %v365 = vpop.permute.xlu0 %364
  %366 = vrot.lane.b32.xlu0 %v361, 126
  %v367 = vpop.permute.xlu0 %366
  %368 = vrot.lane.b32.xlu0 %v338, 126
  %v369 = vpop.permute.xlu0 %368
  %v370 = vsel %vm68, %v363, %v365
  %v371 = vsel %vm68, %v365, %v367
  %v372 = vsel %vm68, %v367, %v369
  %v373 = vcombine.low %v347, %v347
  %374 = vrot.lane.b32.xlu0 %v373, 110
  %v375 = vpop.permute.xlu0 %374
  %376 = vrot.lane.b32.xlu0 %v347, 110
  %v377 = vpop.permute.xlu0 %376
  %378 = vrot.lane.b32.xlu0 %v360, 110
  %v379 = vpop.permute.xlu0 %378
  %380 = vrot.lane.b32.xlu0 %v331, 110
  %v381 = vpop.permute.xlu0 %380
  %v382 = vsel %vm81, %v375, %v377
  %v383 = vsel %vm81, %v377, %v379
  %v384 = vsel %vm81, %v379, %v381
  %v385 = vcombine.high %v338, %v338
  %386 = vrot.lane.b32.xlu0 %v331, 109
  %v387 = vpop.permute.xlu0 %386
  %388 = vrot.lane.b32.xlu0 %v339, 109
  %v389 = vpop.permute.xlu0 %388
  %390 = vrot.lane.b32.xlu0 %v338, 109
  %v391 = vpop.permute.xlu0 %390
  %392 = vrot.lane.b32.xlu0 %v385, 109
  %v393 = vpop.permute.xlu0 %392
  %v394 = vsel %vm94, %v387, %v389
  %v395 = vsel %vm94, %v389, %v391
  %v396 = vsel %vm94, %v391, %v393
  %397 = vrot.lane.b32.xlu0 %v347, 108
  %v398 = vpop.permute.xlu0 %397
  %399 = vrot.lane.b32.xlu0 %v348, 108
  %v400 = vpop.permute.xlu0 %399
  %401 = vrot.lane.b32.xlu0 %v331, 108
  %v402 = vpop.permute.xlu0 %401
  %403 = vrot.lane.b32.xlu0 %v339, 108
  %v404 = vpop.permute.xlu0 %403
  %v405 = vsel %vm106, %v398, %v400
  %v406 = vsel %vm106, %v400, %v402
  %v407 = vsel %vm106, %v402, %v404
  %408 = vrot.lane.b32.xlu0 %v360, 92
  %v409 = vpop.permute.xlu0 %408
  %410 = vrot.lane.b32.xlu0 %v331, 92
  %v411 = vpop.permute.xlu0 %410
  %412 = vrot.lane.b32.xlu0 %v361, 92
  %v413 = vpop.permute.xlu0 %412
  %414 = vrot.lane.b32.xlu0 %v338, 92
  %v415 = vpop.permute.xlu0 %414
  %v416 = vsel %vm118, %v409, %v411
  %v417 = vsel %vm118, %v411, %v413
  %v418 = vsel %vm118, %v413, %v415
  %419 = vrot.lane.b32.xlu0 %v373, 91
  %v420 = vpop.permute.xlu0 %419
  %421 = vrot.lane.b32.xlu0 %v347, 91
  %v422 = vpop.permute.xlu0 %421
  %423 = vrot.lane.b32.xlu0 %v360, 91
  %v424 = vpop.permute.xlu0 %423
  %425 = vrot.lane.b32.xlu0 %v331, 91
  %v426 = vpop.permute.xlu0 %425
  %v427 = vsel %vm130, %v420, %v422
  %v428 = vsel %vm130, %v422, %v424
  %v429 = vsel %vm130, %v424, %v426
  %430 = vrot.lane.b32.xlu0 %v331, 90
  %v431 = vpop.permute.xlu0 %430
  %432 = vrot.lane.b32.xlu0 %v339, 90
  %v433 = vpop.permute.xlu0 %432
  %434 = vrot.lane.b32.xlu0 %v338, 90
  %v435 = vpop.permute.xlu0 %434
  %436 = vrot.lane.b32.xlu0 %v385, 90
  %v437 = vpop.permute.xlu0 %436
  %v438 = vsel %vm142, %v431, %v433
  %v439 = vsel %vm142, %v433, %v435
  %v440 = vsel %vm142, %v435, %v437
  %v443 = vsel %vm146, %v331, %v357
  %v446 = vsel %vm146, %v339, %v358
  %v449 = vsel %vm146, %v338, %v359
  %v451 = vsel %vm156, %v443, %v370
  %v453 = vsel %vm156, %v446, %v371
  %v455 = vsel %vm156, %v449, %v372
  %v457 = vsel %vm163, %v451, %v382
  %v460 = vsel %vm163, %v453, %v383
  %v463 = vsel %vm163, %v455, %v384
  %v467 = vsel %vm146, %v394, %v405
  %v470 = vsel %vm146, %v395, %v406
  %v473 = vsel %vm146, %v396, %v407
  %v475 = vsel %vm156, %v467, %v416
  %v477 = vsel %vm156, %v470, %v417
  %v479 = vsel %vm156, %v473, %v418
  %v481 = vsel %vm163, %v475, %v427
  %v484 = vsel %vm163, %v477, %v428
  %v487 = vsel %vm163, %v479, %v429
  %v490 = vsel %vm146, %v438, 0
  %v493 = vsel %vm146, %v439, 0
  %v496 = vsel %vm146, %v440, 0
  %498 = vmatprep.subr.bf16.mxu0 %v460
  %499 = vmatpush1.bf16.msra.mxu0 %v457
  %500 = vmatprep.subr.bf16.mxu0 %v484
  %501 = vmatpush1.bf16.msra.mxu0 %v481
  %502 = vmatprep.subr.bf16.mxu0 %v493
  %503 = vmatpush1.bf16.msra.mxu0 %v490
  %504 = vmatprep.subr.bf16.mxu0 0
  %505 = vmatpush1.bf16.msra.mxu0 0
  %506 = vmatprep.subr.bf16.mxu0 0
  %507 = vmatpush1.bf16.msra.mxu0 0
  %508 = vmatprep.subr.bf16.mxu0 0
  %509 = vmatpush1.bf16.msra.mxu0 0
  %510 = vmatprep.subr.bf16.mxu0 0
  %511 = vmatpush1.bf16.msra.mxu0 0
  %512 = vmatprep.subr.bf16.mxu0 0
  %513 = vmatpush1.bf16.msra.mxu0 0
  %514 = vmatprep.subr.bf16.mxu0 0
  %515 = vmatpush1.bf16.msra.mxu0 0
  %516 = vmatprep.subr.bf16.mxu0 0
  %517 = vmatpush1.bf16.msra.mxu0 0
  %518 = vmatprep.subr.bf16.mxu0 0
  %519 = vmatpush1.bf16.msra.mxu0 0
  %520 = vmatprep.subr.bf16.mxu0 0
  %521 = vmatpush1.bf16.msra.mxu0 0
  %522 = vmatprep.subr.bf16.mxu0 0
  %523 = vmatpush1.bf16.msra.mxu0 0
  %524 = vmatprep.subr.bf16.mxu0 0
  %525 = vmatpush1.bf16.msra.mxu0 0
  %526 = vmatprep.subr.bf16.mxu0 0
  %527 = vmatpush1.bf16.msra.mxu0 0
  %528 = vmatprep.subr.bf16.mxu0 0
  %529 = vmatpush1.bf16.msra.mxu0 0
  %530 = vmatprep.mubr.bf16.mxu0 0
  %531 = vmatmul.mubr.bf16.gmra.mrb[0].mxu0 %v214
  %v532 = vpop.f32.mrb[0].mxu0
  %v533 = vadd.f32 %v200, %v532
  %v534 = vpop.f32.mrb[0].mxu0
  %v535 = vadd.f32 %v200, %v534
  %v536 = vpop.f32.mrb[0].mxu0
  %v537 = vadd.f32 %v205, %v536
  %v538 = vpop.f32.mrb[0].mxu0
  %v539 = vadd.f32 %v205, %v538
  %540 = vdwg.mxu0
  %541 = vmatprep.subr.bf16.mxu0 0
  %542 = vmatpush1.bf16.msra.mxu0 %v463
  %543 = vmatprep.subr.bf16.mxu0 0
  %544 = vmatpush1.bf16.msra.mxu0 %v487
  %545 = vmatprep.subr.bf16.mxu0 0
  %546 = vmatpush1.bf16.msra.mxu0 %v496
  %547 = vmatprep.subr.bf16.mxu0 0
  %548 = vmatpush1.bf16.msra.mxu0 0
  %549 = vmatprep.subr.bf16.mxu0 0
  %550 = vmatpush1.bf16.msra.mxu0 0
  %551 = vmatprep.subr.bf16.mxu0 0
  %552 = vmatpush1.bf16.msra.mxu0 0
  %553 = vmatprep.subr.bf16.mxu0 0
  %554 = vmatpush1.bf16.msra.mxu0 0
  %555 = vmatprep.subr.bf16.mxu0 0
  %556 = vmatpush1.bf16.msra.mxu0 0
  %557 = vmatprep.subr.bf16.mxu0 0
  %558 = vmatpush1.bf16.msra.mxu0 0
  %559 = vmatprep.subr.bf16.mxu0 0
  %560 = vmatpush1.bf16.msra.mxu0 0
  %561 = vmatprep.subr.bf16.mxu0 0
  %562 = vmatpush1.bf16.msra.mxu0 0
  %563 = vmatprep.subr.bf16.mxu0 0
  %564 = vmatpush1.bf16.msra.mxu0 0
  %565 = vmatprep.subr.bf16.mxu0 0
  %566 = vmatpush1.bf16.msra.mxu0 0
  %567 = vmatprep.subr.bf16.mxu0 0
  %568 = vmatpush1.bf16.msra.mxu0 0
  %569 = vmatprep.subr.bf16.mxu0 0
  %570 = vmatpush1.bf16.msra.mxu0 0
  %571 = vmatprep.subr.bf16.mxu0 0
  %572 = vmatpush1.bf16.msra.mxu0 0
  %573 = vmatprep.mubr.bf16.mxu0 0
  %574 = vmatmul.mubr.bf16.gmra.mrb[0].mxu0 %v214
  %v575 = vpop.f32.mrb[0].mxu0
  %v576 = vadd.f32 %v200, %v575
  %v577 = vpop.f32.mrb[0].mxu0
  %v578 = vpop.f32.mrb[0].mxu0
  %v579 = vadd.f32 %v205, %v578
  %v580 = vpop.f32.mrb[0].mxu0
  %581 = vdwg.mxu0
  %v582 = vmax.f32 %v533, 0.0
  %v583 = vmax.f32 %v535, 0.0
  %v584 = vmax.f32 %v576, 0.0
  %v585 = vmax.f32 %v537, 0.0
  %v586 = vmax.f32 %v539, 0.0
  %v587 = vmax.f32 %v579, 0.0
  %s588 = scalar_lea.vmem %s3, 48
  %589 = vst [vmem:[%s588] sm:$0xff] %v582
  %590 = vst [vmem:[%s588 + $0x8] sm:$0xff] %v583
  %591 = vst [vmem:[%s588 + $0x10] sm:$0xff] %v584
  %592 = vst [vmem:[%s588 + $0x18] sm:$0xff] %v585
  %593 = vst [vmem:[%s588 + $0x20] sm:$0xff] %v586
  %594 = vst [vmem:[%s588 + $0x28] sm:$0xff] %v587
  // Predicated region
  $region14: #{conv_block_forward.1} parent=0 // pred_check
    _
  $region15: #{conv_block_forward.1} parent=0 // pred_check_branch
    %596 = sbr.rel (0) target = $region17
  $region16: #{conv_block_forward.1} parent=0 // pred_region
    _
  $region17: #{conv_block_forward.1} parent=0 // pred_fallthru
    _
  // Predicated region
  $region18: #{conv_block_forward.1} parent=0 // pred_check
    _
  $region19: #{conv_block_forward.1} parent=0 // pred_check_branch
    %598 = sbr.rel (0) target = $region21
  $region20: #{conv_block_forward.1} parent=0 // pred_region
    _
  $region21: #{conv_block_forward.1} parent=0 // pred_fallthru
    _

</llo_original>
